<compile_context>
chip_gen: v5e
topology: v5e:2x2
jax: 0.10.0
libtpu: 0.0.40
codegen_flags: <defaults>
</compile_context>

<pallas_src>
import functools

import jax
import jax.numpy as jnp
from jax.experimental import pallas as pl
from jax.experimental.pallas import tpu as pltpu


# Above the scoped defaults (16 MiB v5e / 32 MiB v6e,v7x), below v7x's 64 MiB
# physical VMEM.  Actual usage at the tile caps below is ~17 MiB.
_VMEM_LIMIT_BYTES = 48 * 1024 * 1024


# ----------------------------- tiling helpers -------------------------------

def _tile_second_minor(n, cap):
    """(padded_n, tile) for a second-to-last block dim.

    The tile must be a multiple of 8 (sublanes) unless it equals the full
    extent.  Prefers an exact divisor of n (no padding); only pads n up to a
    multiple of 8 when no suitable divisor exists (rare; costs one copy).
    """
    if n <= cap:
        return n, n
    top = cap - cap % 8
    for t in range(top, 7, -8):
        if n % t == 0:
            return n, t
    n_pad = ((n + 7) // 8) * 8
    for t in range(top, 7, -8):
        if n_pad % t == 0:
            return n_pad, t
    return n_pad, 8  # unreachable (8 always divides n_pad); kept for safety


def _masked_softmax(y, out_dim):
    """Softmax over the first `out_dim` lanes of a [rows, out_pad] f32 tile.

    Padded lanes are excluded from max/sum and come out as exactly 0.
    Exact division (no approx reciprocal) -- EUP cost is negligible here.
    """
    lane = jax.lax.broadcasted_iota(jnp.int32, y.shape, dimension=y.ndim - 1)
    valid = lane < out_dim
    neg = jnp.finfo(jnp.float32).min
    y = jnp.where(valid, y, neg)
    m = jnp.max(y, axis=-1, keepdims=True)
    e = jnp.exp(y - m)
    e = jnp.where(valid, e, 0.0)
    return e / jnp.sum(e, axis=-1, keepdims=True)


# ----------------------------- Pallas kernels -------------------------------

def _protein_gate_kernel(x_ref, w_ref, b_ref, o_ref, *, out_dim, apply_softmax):
    """x_ref: [tile_b, gate_in] f32; w_ref: [gate_in, out_pad] bf16; b_ref: [1, out_pad] f32."""
    x = x_ref[...].astype(jnp.bfloat16)            # bf16 MXU operand, f32 accum
    y = jnp.dot(x, w_ref[...], preferred_element_type=jnp.float32)
    y = y + b_ref[...]
    if apply_softmax:                              # static per-gate flag
        y = _masked_softmax(y, out_dim)
    o_ref[...] = y


def _reaction_gate_kernel(x_ref, w_ref, b_ref, o_ref, acc_ref, *,
                          out_dim, seq_len, apply_softmax):
    """x_ref: [tile_b, tile_s, gate_in] f32; running f32 sum over the seq grid axis."""
    s = pl.program_id(1)

    @pl.when(s == 0)
    def _():
        acc_ref[...] = jnp.zeros_like(acc_ref)

    # accumulate the sequence sum in f32 (mean applied in the finalizer);
    # zero-padded seq rows (if any) contribute nothing.
    acc_ref[...] += jnp.sum(x_ref[...], axis=1)

    @pl.when(s == pl.num_programs(1) - 1)
    def _():
        mean_x = (acc_ref[...] * (1.0 / float(seq_len))).astype(jnp.bfloat16)
        y = jnp.dot(mean_x, w_ref[...], preferred_element_type=jnp.float32)
        y = y + b_ref[...]
        if apply_softmax:
            y = _masked_softmax(y, out_dim)
        o_ref[...] = y


# ----------------------------- pallas_call wrappers -------------------------

def _protein_gate(x, w, b, out_dim, apply_softmax, *, b_cap=1024):
    """x: [B, gate_in] f32; w: [gate_in, out_pad] bf16; b: [1, out_pad] f32."""
    B, gate_in = x.shape
    out_pad = w.shape[-1]
    B_pad, tile_b = _tile_second_minor(B, b_cap)
    if B_pad != B:
        x = jnp.pad(x, ((0, B_pad - B), (0, 0)))   # rare awkward-batch fallback
    grid = (B_pad // tile_b,)
    kernel = functools.partial(_protein_gate_kernel, out_dim=out_dim,
                               apply_softmax=apply_softmax)
    y = pl.pallas_call(
        kernel,
        out_shape=jax.ShapeDtypeStruct((B_pad, out_pad), jnp.float32),
        grid=grid,
        in_specs=[
            pl.BlockSpec((tile_b, gate_in), lambda i: (i, 0)),
            # weight / bias: constant block index -> fetched once, stays resident
            pl.BlockSpec((gate_in, out_pad), lambda i: (0, 0)),
            pl.BlockSpec((1, out_pad), lambda i: (0, 0)),
        ],
        out_specs=pl.BlockSpec((tile_b, out_pad), lambda i: (i, 0)),
        compiler_params=pltpu.CompilerParams(
            dimension_semantics=("parallel",),
            vmem_limit_bytes=_VMEM_LIMIT_BYTES),
    )(x, w, b)
    return y if B_pad == B else y[:B]


def _reaction_gate(x, w, b, out_dim, apply_softmax, *, b_cap=8, s_cap=512):
    """x: [B, S, gate_in] f32; mean over S via a running-sum 'arbitrary' grid axis."""
    B, S, gate_in = x.shape
    out_pad = w.shape[-1]
    # tile_b also shows up as the second-to-last dim of the output block, so it
    # must be a multiple of 8 or the full batch extent.
    B_pad, tile_b = _tile_second_minor(B, b_cap)
    S_pad, tile_s = _tile_second_minor(S, s_cap)
    pad_b, pad_s = B_pad - B, S_pad - S
    if pad_b or pad_s:
        x = jnp.pad(x, ((0, pad_b), (0, pad_s), (0, 0)))  # rare fallback
    grid = (B_pad // tile_b, S_pad // tile_s)
    kernel = functools.partial(_reaction_gate_kernel, out_dim=out_dim,
                               seq_len=S, apply_softmax=apply_softmax)
    y = pl.pallas_call(
        kernel,
        out_shape=jax.ShapeDtypeStruct((B_pad, out_pad), jnp.float32),
        grid=grid,
        in_specs=[
            pl.BlockSpec((tile_b, tile_s, gate_in), lambda i, s: (i, s, 0)),
            pl.BlockSpec((gate_in, out_pad), lambda i, s: (0, 0)),
            pl.BlockSpec((1, out_pad), lambda i, s: (0, 0)),
        ],
        # output block index constant along the seq axis -> accumulator-resident
        out_specs=pl.BlockSpec((tile_b, out_pad), lambda i, s: (i, 0)),
        scratch_shapes=[pltpu.VMEM((tile_b, gate_in), jnp.float32)],
        compiler_params=pltpu.CompilerParams(
            dimension_semantics=("parallel", "arbitrary"),
            vmem_limit_bytes=_VMEM_LIMIT_BYTES),
    )(x, w, b)
    return y if B_pad == B else y[:B]


# ----------------------------- Module wrapper --------------------------------

class GateModule:
    """JAX/Pallas port of the PyTorch GateModule (one pallas_call per active gate)."""

    def __init__(self, num_experts, num_tasks, gate_type, key):
        if gate_type == 'protein':
            gate_in = 128
        elif gate_type == 'reaction':
            gate_in = 512
        else:
            raise ValueError("gate_type must be 'protein' or 'reaction'")
        self.gate_type = gate_type
        self.gate_in = gate_in
        self.num_tasks = num_tasks
        self.out_dim = num_experts * 2
        # lane-dense, zero-padded output width (multiple of 128) -> unmasked vst
        self.out_pad = ((self.out_dim + 127) // 128) * 128

        n_gates = num_tasks + 1            # gate 0 = share, 1..T = task gates
        keys = jax.random.split(key, 2 * n_gates)
        bound = 1.0 / float(gate_in) ** 0.5

        self.w_list, self.b_list = [], []
        for i in range(n_gates):
            # PyTorch nn.Linear default init: U(-1/sqrt(in), 1/sqrt(in))
            w = jax.random.uniform(keys[2 * i], (self.out_dim, gate_in),
                                   jnp.float32, minval=-bound, maxval=bound)
            b = jax.random.uniform(keys[2 * i + 1], (self.out_dim,),
                                   jnp.float32, minval=-bound, maxval=bound)
            w_pad = jnp.zeros((gate_in, self.out_pad), jnp.float32)
            w_pad = w_pad.at[:, :self.out_dim].set(w.T)
            b_pad = jnp.zeros((1, self.out_pad), jnp.float32)
            b_pad = b_pad.at[:, :self.out_dim].set(b[None, :])
            # bf16 weights: half the weight DMA, bf16 MXU operands (f32 accum)
            self.w_list.append(w_pad.astype(jnp.bfloat16))
            self.b_list.append(b_pad)          # bias stays f32

    def _run_gate(self, x, gate_idx, apply_softmax):
        x = jnp.squeeze(x, axis=1)
        w = self.w_list[gate_idx]
        b = self.b_list[gate_idx]
        if self.gate_type == 'reaction':
            y = _reaction_gate(x, w, b, self.out_dim, apply_softmax)
        else:
            y = _protein_gate(x, w, b, self.out_dim, apply_softmax)
        # TODO(synk): downstream consumers could keep the padded [B, 128] layout
        # (padded lanes are exact zeros) and skip this narrow slice.
        return y[:, :self.out_dim]

    def __call__(self, share_x, task_x):
        assert len(task_x) == self.num_tasks
        share_gate_out = self._run_gate(share_x, 0, apply_softmax=True)
        task_gate_out_list = []
        for i in range(self.num_tasks):
            if task_x[i] is not None:
                task_gate_out_list.append(
                    self._run_gate(task_x[i], i + 1, apply_softmax=False))
            else:
                task_gate_out_list.append(None)
        return share_gate_out, task_gate_out_list


# --------------------------------- Main ---------------------------------------

def _ref_gate(x, w_pad_bf16, b_pad_f32, out_dim, softmax, reduce_mean):
    """Pure-JAX reference matching the kernel math (bf16 operands, f32 accum)."""
    x = jnp.squeeze(x, axis=1)
    if reduce_mean:
        x = jnp.mean(x, axis=1)
    y = jnp.dot(x.astype(jnp.bfloat16), w_pad_bf16[:, :out_dim],
                preferred_element_type=jnp.float32) + b_pad_f32[0, :out_dim]
    if softmax:
        y = jax.nn.softmax(y, axis=-1)
    return y


if __name__ == "__main__":
    key = jax.random.PRNGKey(0)
    kp1, kp2, ks1, kt1, ks2, kt2 = jax.random.split(key, 6)

    num_experts = 4
    num_tasks = 2
    B = 2

    # ---------------- protein gate (gate_in = 128) ----------------
    mod_p = GateModule(num_experts, num_tasks, 'protein', kp1)
    share_x = jax.random.normal(ks1, (B, 1, 128), jnp.float32)
    task_x = [jax.random.normal(kt1, (B, 1, 128), jnp.float32), None]

    share_out, task_outs = mod_p(share_x, task_x)
    share_out = jax.block_until_ready(share_out)
    jax.block_until_ready(task_outs[0])

    assert share_out.shape == (B, num_experts * 2)
    assert task_outs[1] is None
    ref_share = _ref_gate(share_x, mod_p.w_list[0], mod_p.b_list[0],
                          mod_p.out_dim, True, False)
    ref_task0 = _ref_gate(task_x[0], mod_p.w_list[1], mod_p.b_list[1],
                          mod_p.out_dim, False, False)
    assert jnp.allclose(share_out, ref_share, atol=2e-3, rtol=2e-3)
    assert jnp.allclose(task_outs[0], ref_task0, atol=2e-3, rtol=2e-3)

    # ---------------- reaction gate (gate_in = 512, seq mean) ----------------
    S = 8
    mod_r = GateModule(num_experts, num_tasks, 'reaction', kp2)
    share_xr = jax.random.normal(ks2, (B, 1, S, 512), jnp.float32)
    task_xr = [None, jax.random.normal(kt2, (B, 1, S, 512), jnp.float32)]

    share_out_r, task_outs_r = mod_r(share_xr, task_xr)
    share_out_r = jax.block_until_ready(share_out_r)
    jax.block_until_ready(task_outs_r[1])

    assert share_out_r.shape == (B, num_experts * 2)
    assert task_outs_r[0] is None
    ref_share_r = _ref_gate(share_xr, mod_r.w_list[0], mod_r.b_list[0],
                            mod_r.out_dim, True, True)
    ref_task1_r = _ref_gate(task_xr[1], mod_r.w_list[2], mod_r.b_list[2],
                            mod_r.out_dim, False, True)
    assert jnp.allclose(share_out_r, ref_share_r, atol=2e-3, rtol=2e-3)
    assert jnp.allclose(task_outs_r[1], ref_task1_r, atol=2e-3, rtol=2e-3)

    print("KERNEL_OK")
</pallas_src>

<mosaic_0001>
module attributes {stable_mosaic.version = 11 : i64} {
  func.func @_protein_gate_kernel(%arg0: i32, %arg1: memref<2x128xf32, #tpu.memory_space<vmem>>, %arg2: memref<128x128xbf16, #tpu.memory_space<vmem>>, %arg3: memref<1x128xf32, #tpu.memory_space<vmem>>, %arg4: memref<2x128xf32, #tpu.memory_space<vmem>>) attributes {dimension_semantics = [#tpu.dimension_semantics<parallel>], iteration_bounds = array<i64: 1>, scalar_prefetch = 0 : i64, scratch_operands = 0 : i64, tpu.core_type = #tpu.core_type<tc>, window_params = [{transform_indices = @transform_0, window_bounds = array<i64: 2, 128>}, {pipeline_mode = #tpu.pipeline_mode<synchronous>, transform_indices = @transform_1, window_bounds = array<i64: 128, 128>}, {pipeline_mode = #tpu.pipeline_mode<synchronous>, transform_indices = @transform_2, window_bounds = array<i64: 1, 128>}, {transform_indices = @transform_3, window_bounds = array<i64: 2, 128>}]} {
    %c0 = arith.constant 0 : index
    %c0_0 = arith.constant 0 : index
    %0 = vector.load %arg1[%c0, %c0_0] : memref<2x128xf32, #tpu.memory_space<vmem>>, vector<2x128xf32>
    %1 = arith.truncf %0 : vector<2x128xf32> to vector<2x128xbf16>
    %c0_1 = arith.constant 0 : index
    %c0_2 = arith.constant 0 : index
    %2 = vector.load %arg2[%c0_1, %c0_2] : memref<128x128xbf16, #tpu.memory_space<vmem>>, vector<128x128xbf16>
    %cst = arith.constant dense<0.000000e+00> : vector<2x128xf32>
    %3 = tpu.matmul %1, %2, %cst {dimension_numbers = #tpu.dot_dimension_numbers<[1], [0], [0], [1], [0, 0, 1, 1], [], []>} : vector<2x128xbf16>, vector<128x128xbf16>, vector<2x128xf32> -> vector<2x128xf32>
    %c0_3 = arith.constant 0 : index
    %c0_4 = arith.constant 0 : index
    %4 = vector.load %arg3[%c0_3, %c0_4] : memref<1x128xf32, #tpu.memory_space<vmem>>, vector<1x128xf32>
    %5 = vector.broadcast %4 : vector<1x128xf32> to vector<2x128xf32>
    %6 = arith.addf %3, %5 : vector<2x128xf32>
    %7 = tpu.iota {dimensions = array<i32: 1>} : vector<2x128xi32>
    %c8_i32 = arith.constant 8 : i32
    %8 = vector.broadcast %c8_i32 : i32 to vector<2x128xi32>
    %9 = arith.cmpi slt, %7, %8 : vector<2x128xi32>
    %cst_5 = arith.constant -3.40282347E+38 : f32
    %10 = vector.broadcast %cst_5 : f32 to vector<2x128xf32>
    %11 = arith.select %9, %6, %10 : vector<2x128xi1>, vector<2x128xf32>
    %cst_6 = arith.constant dense<0xFF800000> : vector<2xf32>
    %12 = vector.multi_reduction <maximumf>, %11, %cst_6 [1] : vector<2x128xf32> to vector<2xf32>
    %13 = vector.shape_cast %12 : vector<2xf32> to vector<2x1xf32>
    %14 = vector.broadcast %13 : vector<2x1xf32> to vector<2x128xf32>
    %15 = arith.subf %11, %14 : vector<2x128xf32>
    %16 = math.exp %15 : vector<2x128xf32>
    %cst_7 = arith.constant 0.000000e+00 : f32
    %17 = vector.broadcast %cst_7 : f32 to vector<2x128xf32>
    %18 = arith.select %9, %16, %17 : vector<2x128xi1>, vector<2x128xf32>
    %cst_8 = arith.constant dense<0.000000e+00> : vector<2xf32>
    %19 = vector.multi_reduction <add>, %18, %cst_8 [1] : vector<2x128xf32> to vector<2xf32>
    %20 = vector.shape_cast %19 : vector<2xf32> to vector<2x1xf32>
    %21 = vector.broadcast %20 : vector<2x1xf32> to vector<2x128xf32>
    %22 = arith.divf %18, %21 : vector<2x128xf32>
    %c0_9 = arith.constant 0 : index
    %c0_10 = arith.constant 0 : index
    %23 = vector.load %arg4[%c0_9, %c0_10] : memref<2x128xf32, #tpu.memory_space<vmem>>, vector<2x128xf32>
    tpu.vector_store %arg4[%c0_9, %c0_10], %22 {strides = array<i32>} : memref<2x128xf32, #tpu.memory_space<vmem>>, vector<2x128xf32>,
    return
  }
  func.func @transform_0(%arg0: i32) -> (i32, i32) {
    %c0_i32 = arith.constant 0 : i32
    %c0_i32_0 = arith.constant 0 : i32
    return %arg0, %c0_i32 : i32, i32
  }
  func.func @transform_1(%arg0: i32) -> (i32, i32) {
    %c0_i32 = arith.constant 0 : i32
    %c0_i32_0 = arith.constant 0 : i32
    %c0_i32_1 = arith.constant 0 : i32
    return %c0_i32, %c0_i32_0 : i32, i32
  }
  func.func @transform_2(%arg0: i32) -> (i32, i32) {
    %c0_i32 = arith.constant 0 : i32
    %c0_i32_0 = arith.constant 0 : i32
    %c0_i32_1 = arith.constant 0 : i32
    return %c0_i32, %c0_i32_0 : i32, i32
  }
  func.func @transform_3(%arg0: i32) -> (i32, i32) {
    %c0_i32 = arith.constant 0 : i32
    %c0_i32_0 = arith.constant 0 : i32
    return %arg0, %c0_i32 : i32, i32
  }
}

</mosaic_0001>

<llo_original>
// kernel: tpu_custom_call.1
$region0: #{tpu_custom_call.1}
  #allocation0 [shape = 'u32[]', space=smem, size = 0x4, offset = 0x4, fixed_abs, tag = 'smem constant byte address 0x4 - core index']
  #allocation1 [shape = 'u32[72,128]{1,0:T(1,128)}', space=vmem, size = 0x9000, scoped, tag = 'internal scratch']
  %s0 = inlined_call_operand.hbm [shape: f32[2,128], index: 0, kind: input, shape index: {}]
  %s1 = inlined_call_operand.hbm [shape: bf16[128,128], index: 1, kind: input, shape index: {}]
  %s2 = inlined_call_operand.vmem [shape: f32[1,128], index: 2, kind: input, shape index: {}]
  %s3 = inlined_call_operand.hbm [shape: f32[2,128], index: 3, kind: output, shape index: {}]
  %s4 = sld [smem:[#allocation0]]
  $region30: #{tpu_custom_call.1} parent=0
    _
  %s6 = ssub.s32 1, %s4
  %s7 = scalar_select 0, %s6, %s4
  $region1: #{tpu_custom_call.1} parent=0
    #allocation2 [shape = 'u8[1024]{0}', space=vmem, size = 0x400, scoped, tag = 'input window, operand 0, single buffered']
    #allocation3 [shape = 's32[1]{0}', space=sflag, size = 0x4, scoped, tag = 'scoped memory for tpu_custom_call.1']
    #allocation4 [shape = 's32[1]{0}', space=sflag, size = 0x4, scoped, tag = 'scoped memory for tpu_custom_call.1']
    #allocation5 [shape = 'u8[32768]{0}', space=vmem, size = 0x8000, scoped, tag = 'input window, operand 1, single buffered']
    #allocation6 [shape = 's32[1]{0}', space=sflag, size = 0x4, scoped, tag = 'scoped memory for tpu_custom_call.1']
    #allocation7 [shape = 'u8[1024]{0}', space=vmem, size = 0x400, scoped, tag = 'output window, operand 0, single buffered']
    %8 = vsyncpa [#allocation3], 0
    %9 = vsyncpa [#allocation6], 0
    %10 = vsyncpa [#allocation4], 0
    // Predicated region
    $region2: #{tpu_custom_call.1} parent=1 // pred_check
      _
    $region3: #{tpu_custom_call.1} parent=1 // pred_check_branch
      %12 = sbr.rel (0) target = $region5
    $region4: #{tpu_custom_call.1} parent=1 // pred_region
      %14 = vsyncadd [#allocation3], 0
      %s16 = sshll.u32 %s0, 4
      %s17 = int_to_ptr.hbm [resolvable:$true] %s16
      %s18 = sshll.u32 [#allocation2], 4
      %s19 = int_to_ptr.vmem [resolvable:$true] %s18
      %21 = dma.hbm_to_vmem [thread:$0]  %s17, 32, %s19, [#allocation3]
    $region5: #{tpu_custom_call.1} parent=1 // pred_fallthru
      _
    // Predicated region
    $region6: #{tpu_custom_call.1} parent=1 // pred_check
      _
    $region7: #{tpu_custom_call.1} parent=1 // pred_check_branch
      %23 = sbr.rel (0) target = $region9
    $region8: #{tpu_custom_call.1} parent=1 // pred_region
      %25 = vsyncadd [#allocation6], 0
      %s26 = sshll.u32 %s1, 4
      %s27 = int_to_ptr.hbm [resolvable:$true] %s26
      %s28 = sshll.u32 [#allocation5], 4
      %s29 = int_to_ptr.vmem [resolvable:$true] %s28
      %34 = dma.hbm_to_vmem [thread:$0]  %s27, 1024, %s29, [#allocation6], 64, 64, 4
    $region9: #{tpu_custom_call.1} parent=1 // pred_fallthru
      _
    // Predicated region
    $region10: #{tpu_custom_call.1} parent=1 // pred_check
      _
    $region11: #{tpu_custom_call.1} parent=1 // pred_check_branch
      %36 = sbr.rel (0) target = $region13
    $region12: #{tpu_custom_call.1} parent=1 // pred_region
      _
    $region13: #{tpu_custom_call.1} parent=1 // pred_fallthru
      _
    // Predicated region
    $region14: #{tpu_custom_call.1} parent=1 // pred_check
      _
    $region15: #{tpu_custom_call.1} parent=1 // pred_check_branch
      %38 = sbr.rel (0) target = $region17
    $region16: #{tpu_custom_call.1} parent=1 // pred_region
      %40 = dma.done [#allocation3], 32
    $region17: #{tpu_custom_call.1} parent=1 // pred_fallthru
      _
    // Predicated region
    $region18: #{tpu_custom_call.1} parent=1 // pred_check
      _
    $region19: #{tpu_custom_call.1} parent=1 // pred_check_branch
      %42 = sbr.rel (0) target = $region21
    $region20: #{tpu_custom_call.1} parent=1 // pred_region
      %44 = dma.done [#allocation6], 1024
    $region21: #{tpu_custom_call.1} parent=1 // pred_fallthru
      _
    %v45 = vld [vmem:[#allocation2] sm:$0x3]
    %v46 = vpack.c.bf16 %v45, %v45
    %v47 = vld [vmem:[#allocation5] sm:$0xf]
    %v48 = vld [vmem:[#allocation5 + $0x4] sm:$0xf]
    %v49 = vld [vmem:[#allocation5 + $0x8] sm:$0xf]
    %v50 = vld [vmem:[#allocation5 + $0xc] sm:$0xf]
    %v51 = vld [vmem:[#allocation5 + $0x10] sm:$0xf]
    %v52 = vld [vmem:[#allocation5 + $0x14] sm:$0xf]
    %v53 = vld [vmem:[#allocation5 + $0x18] sm:$0xf]
    %v54 = vld [vmem:[#allocation5 + $0x1c] sm:$0xf]
    %v55 = vld [vmem:[#allocation5 + $0x20] sm:$0xf]
    %v56 = vld [vmem:[#allocation5 + $0x24] sm:$0xf]
    %v57 = vld [vmem:[#allocation5 + $0x28] sm:$0xf]
    %v58 = vld [vmem:[#allocation5 + $0x2c] sm:$0xf]
    %v59 = vld [vmem:[#allocation5 + $0x30] sm:$0xf]
    %v60 = vld [vmem:[#allocation5 + $0x34] sm:$0xf]
    %v61 = vld [vmem:[#allocation5 + $0x38] sm:$0xf]
    %v62 = vld [vmem:[#allocation5 + $0x3c] sm:$0xf]
    %v63 = vld [vmem:[%s2] sm:$0x1]
    %v65 = vperm.slane %v63, 0
    %v83 = vunpack.c.l.b16 %v47
    %v84 = vunpack.c.l.b16 %v48
    %v85 = vunpack.c.l.b16 %v49
    %v86 = vunpack.c.l.b16 %v50
    %v87 = vunpack.c.l.b16 %v51
    %v88 = vunpack.c.l.b16 %v52
    %v89 = vunpack.c.l.b16 %v53
    %v90 = vunpack.c.l.b16 %v54
    %v91 = vunpack.c.l.b16 %v55
    %v92 = vunpack.c.l.b16 %v56
    %v93 = vunpack.c.l.b16 %v57
    %v94 = vunpack.c.l.b16 %v58
    %v95 = vunpack.c.l.b16 %v59
    %v96 = vunpack.c.l.b16 %v60
    %v97 = vunpack.c.l.b16 %v61
    %v98 = vunpack.c.l.b16 %v62
    %v99 = vpack.c.b16 %v84, %v83
    %v100 = vpack.c.b16 %v86, %v85
    %v101 = vpack.c.b16 %v88, %v87
    %v102 = vpack.c.b16 %v90, %v89
    %v103 = vpack.c.b16 %v92, %v91
    %v104 = vpack.c.b16 %v94, %v93
    %v105 = vpack.c.b16 %v96, %v95
    %v106 = vpack.c.b16 %v98, %v97
    %115 = vmatpush.bf16.msra.mxu0 %v106
    %116 = vmatpush.bf16.msra.mxu0 %v105
    %117 = vmatpush.bf16.msra.mxu0 %v104
    %118 = vmatpush.bf16.msra.mxu0 %v103
    %119 = vmatpush.bf16.msra.mxu0 %v102
    %120 = vmatpush.bf16.msra.mxu0 %v101
    %121 = vmatpush.bf16.msra.mxu0 %v100
    %122 = vmatpush.bf16.msra.mxu0 %v99
    %123 = vmatmul.bf16.gmra.mxu0 %v46
    %v124 = vpop.f32.mrf.mxu0
    %v125 = vadd.f32 %v65, %v124
    %v126 = vpop.f32.mrf.mxu0
    %127 = vdwg.mxu0
    %v128 = vlaneseq
    %v129 = vand.u32 %v128, 127
    %vm130 = vcmp.lt.s32.totalorder %v129, 8
    %v131 = vsel %vm130, %v125, -3.4028235e+38
    %vm132 = vcmask 1041408
    %v133 = vsel %vm132, %v131, -inf
    %134 = vmax.xlane.f32.xlu0 %v133
    %v135 = vpop.xlane.xlu0 %134
    %v136 = vsub.f32 %v131, %v135
    %v137 = vmul.f32 %v136, 1.442695
    %v138 = vpow.pop %v137
    %v139 = vsel %vm130, %v138, 0.0
    %v140 = vsel %vm132, %v139, 0.0
    %141 = vadd.xlane.f32.xlu0 %v140
    %v142 = vpop.xlane.xlu0 %141
    %v143 = vrcp.pop %v142
    %v144 = vmul.f32 %v142, %v143
    %v145 = vsub.f32 1.0, %v144
    %v146 = vmul.f32 %v143, %v145
    %v147 = vadd.f32 %v143, %v146
    %vm148 = vweird.f32 %v142
    %vm149 = vweird.f32 %v143
    %vm150 = vmor %vm148, %vm149
    %v151 = vsel %vm150, %v143, %v147
    %v152 = vand.u32 2147483647, %v142
    %vm153 = vcmp.eq.f32.partialorder %v152, 8.507059e+37
    %v154 = vand.u32 %v142, 2147483648
    %v155 = vor.u32 1.1754944e-38, %v154
    %v156 = vsel %vm153, %v155, %v151
    %v157 = vmul.f32 %v139, %v156
    %158 = vst [vmem:[#allocation7] sm:$0x3] %v157
    // Predicated region
    $region22: #{tpu_custom_call.1} parent=1 // pred_check
      _
    $region23: #{tpu_custom_call.1} parent=1 // pred_check_branch
      %160 = sbr.rel (0) target = $region25
    $region24: #{tpu_custom_call.1} parent=1 // pred_region
      %162 = vsyncadd [#allocation4], 0
      %s164 = sshll.u32 [#allocation7], 4
      %s165 = int_to_ptr.vmem [resolvable:$true] %s164
      %s166 = sshll.u32 %s3, 4
      %s167 = int_to_ptr.hbm [resolvable:$true] %s166
      %169 = dma.vmem_to_hbm [thread:$0]  %s165, 32, %s167, [#allocation4]
    $region25: #{tpu_custom_call.1} parent=1 // pred_fallthru
      _
    // Predicated region
    $region26: #{tpu_custom_call.1} parent=1 // pred_check
      _
    $region27: #{tpu_custom_call.1} parent=1 // pred_check_branch
      %171 = sbr.rel (0) target = $region29
    $region28: #{tpu_custom_call.1} parent=1 // pred_region
      %173 = dma.done [#allocation4], 32
    $region29: #{tpu_custom_call.1} parent=1 // pred_fallthru
      _
    %174 = vsyncpa [#allocation3], 1
    %175 = vsyncpa [#allocation6], 1
    %176 = vsyncpa [#allocation4], 1

</llo_original>
